<compile_context>
chip_gen: v7x
topology: tpu7x:2x2x1
jax: 0.10.0
libtpu: 0.0.40
codegen_flags: <defaults>
</compile_context>

<pallas_src>
import numpy as np
import jax
import jax.numpy as jnp
from jax.experimental import pallas as pl
from jax.experimental.pallas import tpu as pltpu


def _denorm_kernel(x_ref, sb_ref, o_ref):
    # x_ref / o_ref: (TM, TL) tile of the flattened (N*C, H*W) tensor.
    # sb_ref: (TM, 2) f32; col 0 = scale (1/std), col 1 = bias (-mean/std).
    # The columns broadcast for free along the lane dimension -> one fused
    # mul+add per vreg on the VPU; the kernel is HBM-bound on every chip.
    x = x_ref[...].astype(jnp.float32)
    sb = sb_ref[...]
    o_ref[...] = (x * sb[:, 0:1] + sb[:, 1:2]).astype(o_ref.dtype)


# ~6 MiB tiles; with double-buffered in + out (~4x tile) plus compiler scratch
# this fits the 48 MiB scoped-VMEM limit requested below.
_TARGET_TILE_BYTES = 6 * 1024 * 1024
_VMEM_LIMIT_BYTES = 48 * 1024 * 1024
# Below this total size the fixed pallas_call overhead dominates -> jnp path.
_MIN_PALLAS_BYTES = 256 * 1024


def _choose_tiles(R, L, itemsize):
    """Pick (TM, TL) for the flattened (R, L) view.

    Invariants:
      * TL is the full lane extent L or a multiple of 128.
      * TM is the full row extent R or a multiple of the dtype-native sublane
        count (8 for 32-bit, 16 for 16-bit, 32 for 8-bit dtypes).
      * Tensors above ~1 MiB get >= 4 grid steps (pipeline overlap + megacore).
    """
    sub = 8 * max(1, 4 // itemsize)          # dtype-native sublane multiple
    total_bytes = R * L * itemsize

    if total_bytes <= 1 * 1024 * 1024:
        min_steps = 1
    elif total_bytes <= 8 * 1024 * 1024:
        min_steps = 4
    else:
        min_steps = 8
    tile_bytes = max(1, min(_TARGET_TILE_BYTES, total_bytes // min_steps))

    row_bytes = L * itemsize
    if sub * row_bytes <= tile_bytes or L <= 128:
        # Full lane extent (contiguous DMA); tile over rows.
        TL = L
        if R <= sub:
            TM = R
        else:
            rows = (tile_bytes // max(1, row_bytes)) // sub * sub
            rows = max(rows, sub)
            TM = R if rows >= R else rows
    else:
        # Even one sublane-slab of the full width exceeds the tile budget:
        # tile the lane dimension too.
        TM = R if R < sub else sub
        lanes = (tile_bytes // max(1, TM * itemsize)) // 128 * 128
        lanes = max(lanes, 128)
        TL = L if lanes >= L else lanes
    return TM, TL


def denormalize(x: jax.Array, mean, std, *, min_pallas_bytes=_MIN_PALLAS_BYTES) -> jax.Array:
    """(x - mean) / std with per-channel mean/std, x in NCHW layout."""
    dtype = x.dtype
    N, C, H, W = x.shape
    itemsize = np.dtype(dtype).itemsize

    # --- host-side parameter handling (mean/std are static module params) ---
    mean_arr = np.asarray(mean, dtype=np.float64).reshape(-1)
    std_arr = np.asarray(std, dtype=np.float64).reshape(-1)
    if mean_arr.size == 1:
        mean_arr = np.full((C,), mean_arr[0])
    if std_arr.size == 1:
        std_arr = np.full((C,), std_arr[0])
    assert mean_arr.shape == (C,) and std_arr.shape == (C,)

    # Match the PyTorch module: the zero check runs on std converted to the
    # input dtype (also guard the original values).
    std_cast = np.asarray(std_arr.astype(np.dtype(dtype)), dtype=np.float64)
    if np.any(std_cast == 0.0) or np.any(std_arr == 0.0):
        raise ValueError(
            f"std evaluated to zero after conversion to {dtype}, "
            "leading to division by zero."
        )

    # Fold (x - mean)/std into a divide-free per-channel FMA, computed from the
    # original (un-quantized) parameters in float32.
    scale_c = (1.0 / std_arr).astype(np.float32)        # (C,)
    bias_c = (-mean_arr / std_arr).astype(np.float32)   # (C,)

    # --- flatten to a lane-dense 2D view: row = (n, c) plane, col = h*w ---
    R, L = N * C, H * W
    total_bytes = R * L * itemsize

    if total_bytes < min_pallas_bytes:
        # Tiny tensors: fixed pallas_call overhead dominates; one fused XLA op.
        scale = jnp.asarray(scale_c, jnp.float32).reshape(1, C, 1, 1)
        bias = jnp.asarray(bias_c, jnp.float32).reshape(1, C, 1, 1)
        return (x.astype(jnp.float32) * scale + bias).astype(dtype)

    x2 = x.reshape(R, L)
    # Fused (R, 2) side input: col 0 = scale, col 1 = bias -> a single tiny
    # per-row-block DMA instead of two.
    sb_rows = jnp.asarray(
        np.stack([np.tile(scale_c, N), np.tile(bias_c, N)], axis=1),
        jnp.float32,
    )  # (R, 2)

    TM, TL = _choose_tiles(R, L, itemsize)
    # Invariant: lane-tiling axis j is the innermost grid axis so the (TM, 2)
    # scale/bias block index is constant across inner steps (no re-fetch).
    grid = (pl.cdiv(R, TM), pl.cdiv(L, TL))

    out2 = pl.pallas_call(
        _denorm_kernel,
        out_shape=jax.ShapeDtypeStruct((R, L), dtype),
        grid=grid,
        in_specs=[
            pl.BlockSpec((TM, TL), lambda i, j: (i, j)),   # x tile
            pl.BlockSpec((TM, 2), lambda i, j: (i, 0)),    # fused scale/bias (f32)
        ],
        out_specs=pl.BlockSpec((TM, TL), lambda i, j: (i, j)),
        compiler_params=pltpu.CompilerParams(
            dimension_semantics=("parallel", "parallel"),
            vmem_limit_bytes=_VMEM_LIMIT_BYTES,
        ),
    )(x2, sb_rows)

    return out2.reshape(N, C, H, W)


if __name__ == "__main__":
    key = jax.random.PRNGKey(0)
    N, C, H, W = 2, 4, 16, 16
    x = jax.random.normal(key, (N, C, H, W), dtype=jnp.float32)

    # Deterministic per-channel parameters (module __init__ takes mean, std).
    mean = [0.1, 0.2, 0.3, 0.4]
    std = [0.5, 0.6, 0.7, 0.8]

    # Force the Pallas path (the default would take the tiny-input jnp fallback
    # at this small example size).
    out = denormalize(x, mean, std, min_pallas_bytes=0)
    out = jax.block_until_ready(out)

    # Reference check in plain JAX.
    m = jnp.asarray(mean, jnp.float32).reshape(1, C, 1, 1)
    s = jnp.asarray(std, jnp.float32).reshape(1, C, 1, 1)
    ref = (x - m) / s
    assert jnp.allclose(out, ref, atol=1e-5, rtol=1e-5)

    # Default path (tiny-input fallback) must agree too.
    out_small = jax.block_until_ready(denormalize(x, mean, std))
    assert jnp.allclose(out_small, ref, atol=1e-5, rtol=1e-5)

    print("KERNEL_OK")
</pallas_src>

<mosaic_0001>
module attributes {stable_mosaic.version = 11 : i64} {
  func.func @_denorm_kernel(%arg0: i32, %arg1: i32, %arg2: memref<8x256xf32, #tpu.memory_space<vmem>>, %arg3: memref<8x2xf32, #tpu.memory_space<vmem>>, %arg4: memref<8x256xf32, #tpu.memory_space<vmem>>) attributes {dimension_semantics = [#tpu.dimension_semantics<parallel>, #tpu.dimension_semantics<parallel>], iteration_bounds = array<i64: 1, 1>, scalar_prefetch = 0 : i64, scratch_operands = 0 : i64, tpu.core_type = #tpu.core_type<tc>, window_params = [{transform_indices = @transform_0, window_bounds = array<i64: 8, 256>}, {transform_indices = @transform_1, window_bounds = array<i64: 8, 2>}, {transform_indices = @transform_2, window_bounds = array<i64: 8, 256>}]} {
    %c0 = arith.constant 0 : index
    %c0_0 = arith.constant 0 : index
    %0 = vector.load %arg2[%c0, %c0_0] : memref<8x256xf32, #tpu.memory_space<vmem>>, vector<8x256xf32>
    %c0_1 = arith.constant 0 : index
    %c0_2 = arith.constant 0 : index
    %1 = vector.load %arg3[%c0_1, %c0_2] : memref<8x2xf32, #tpu.memory_space<vmem>>, vector<8x2xf32>
    %2 = vector.extract_strided_slice %1 {offsets = [0, 0], sizes = [8, 1], strides = [1, 1]} : vector<8x2xf32> to vector<8x1xf32>
    %3 = vector.broadcast %2 : vector<8x1xf32> to vector<8x256xf32>
    %4 = arith.mulf %0, %3 : vector<8x256xf32>
    %5 = vector.extract_strided_slice %1 {offsets = [0, 1], sizes = [8, 1], strides = [1, 1]} : vector<8x2xf32> to vector<8x1xf32>
    %6 = vector.broadcast %5 : vector<8x1xf32> to vector<8x256xf32>
    %7 = arith.addf %4, %6 : vector<8x256xf32>
    %c0_3 = arith.constant 0 : index
    %c0_4 = arith.constant 0 : index
    %8 = vector.load %arg4[%c0_3, %c0_4] : memref<8x256xf32, #tpu.memory_space<vmem>>, vector<8x256xf32>
    tpu.vector_store %arg4[%c0_3, %c0_4], %7 {strides = array<i32>} : memref<8x256xf32, #tpu.memory_space<vmem>>, vector<8x256xf32>,
    return
  }
  func.func @transform_0(%arg0: i32, %arg1: i32) -> (i32, i32) {
    %c0_i32 = arith.constant 0 : i32
    return %arg0, %arg1 : i32, i32
  }
  func.func @transform_1(%arg0: i32, %arg1: i32) -> (i32, i32) {
    %c0_i32 = arith.constant 0 : i32
    %c0_i32_0 = arith.constant 0 : i32
    return %arg0, %c0_i32 : i32, i32
  }
  func.func @transform_2(%arg0: i32, %arg1: i32) -> (i32, i32) {
    %c0_i32 = arith.constant 0 : i32
    return %arg0, %arg1 : i32, i32
  }
}

</mosaic_0001>

<llo_original>
// kernel: tpu_custom_call.1
$region0: #{tpu_custom_call.1}
  #allocation0 [shape = 'u32[]', space=smem, size = 0x4, offset = 0x4, fixed_abs, tag = 'smem constant byte address 0x4 - core index']
  #allocation1 [shape = 'u32[144,128]{1,0:T(1,128)}', space=vmem, size = 0x12000, scoped, tag = 'internal scratch']
  %s0 = inlined_call_operand.hbm [shape: f32[8,256], index: 0, kind: input, shape index: {}]
  %s1 = inlined_call_operand.vmem [shape: f32[8,2], index: 1, kind: input, shape index: {}]
  %s2 = inlined_call_operand.hbm [shape: f32[8,256], index: 2, kind: output, shape index: {}]
  %s3 = sld [smem:[#allocation0]]
  $region22: #{tpu_custom_call.1} parent=0
    _
  %s5 = ssub.s32 1, %s3
  %s6 = scalar_select 0, %s5, %s3
  $region1: #{tpu_custom_call.1} parent=0
    #allocation2 [shape = 'u8[8192]{0}', space=vmem, size = 0x2000, scoped, tag = 'input window, operand 0, single buffered']
    #allocation3 [shape = 's32[1]{0}', space=sflag, size = 0x4, scoped, tag = 'scoped memory for tpu_custom_call.1']
    #allocation4 [shape = 's32[1]{0}', space=sflag, size = 0x4, scoped, tag = 'scoped memory for tpu_custom_call.1']
    #allocation5 [shape = 'u8[8192]{0}', space=vmem, size = 0x2000, scoped, tag = 'output window, operand 0, single buffered']
    %7 = vsyncpa [#allocation3], 0
    %8 = vsyncpa [#allocation4], 0
    // Predicated region
    $region2: #{tpu_custom_call.1} parent=1 // pred_check
      _
    $region3: #{tpu_custom_call.1} parent=1 // pred_check_branch
      %10 = sbr.rel (0) target = $region5
    $region4: #{tpu_custom_call.1} parent=1 // pred_region
      %s12 = ssub.s32 256, 256
      %13 = vsyncadd [#allocation3], %s12
      %s15 = sshll.u32 [#allocation2], 4
      %s16 = int_to_ptr.vmem [resolvable:$true] %s15
      %18 = dma.hbm_to_vmem [thread:$0]  %s0, 256, %s16, [#allocation3]
    $region5: #{tpu_custom_call.1} parent=1 // pred_fallthru
      _
    // Predicated region
    $region6: #{tpu_custom_call.1} parent=1 // pred_check
      _
    $region7: #{tpu_custom_call.1} parent=1 // pred_check_branch
      %20 = sbr.rel (0) target = $region9
    $region8: #{tpu_custom_call.1} parent=1 // pred_region
      _
    $region9: #{tpu_custom_call.1} parent=1 // pred_fallthru
      _
    // Predicated region
    $region10: #{tpu_custom_call.1} parent=1 // pred_check
      _
    $region11: #{tpu_custom_call.1} parent=1 // pred_check_branch
      %22 = sbr.rel (0) target = $region13
    $region12: #{tpu_custom_call.1} parent=1 // pred_region
      %23 = dma.done [#allocation3], 256
    $region13: #{tpu_custom_call.1} parent=1 // pred_fallthru
      _
    %v24 = vld [vmem:[#allocation2] sm:$0xff]
    %v25 = vld [vmem:[#allocation2 + $0x8] sm:$0xff]
    %v26 = vld [vmem:[%s1] sm:$0xff]
    %28 = vset.pattern.permute.xlu0 0
    %29 = vperm.xlu0 %28, %v26
    %v30 = vpop.permute.xlu0 %29
    %v32 = vmul.f32 %v24, %v30
    %v33 = vmul.f32 %v25, %v30
    %34 = vset.pattern.permute.xlu0 1
    %35 = vperm.xlu0 %34, %v26
    %v36 = vpop.permute.xlu0 %35
    %v38 = vadd.f32 %v32, %v36
    %v39 = vadd.f32 %v33, %v36
    %40 = vst [vmem:[#allocation5] sm:$0xff] %v38
    %41 = vst [vmem:[#allocation5 + $0x8] sm:$0xff] %v39
    // Predicated region
    $region14: #{tpu_custom_call.1} parent=1 // pred_check
      _
    $region15: #{tpu_custom_call.1} parent=1 // pred_check_branch
      %43 = sbr.rel (0) target = $region17
    $region16: #{tpu_custom_call.1} parent=1 // pred_region
      %s45 = ssub.s32 256, 256
      %46 = vsyncadd [#allocation4], %s45
      %s48 = sshll.u32 [#allocation5], 4
      %s49 = int_to_ptr.vmem [resolvable:$true] %s48
      %51 = dma.vmem_to_hbm [thread:$0]  %s49, 256, %s2, [#allocation4]
    $region17: #{tpu_custom_call.1} parent=1 // pred_fallthru
      _
    // Predicated region
    $region18: #{tpu_custom_call.1} parent=1 // pred_check
      _
    $region19: #{tpu_custom_call.1} parent=1 // pred_check_branch
      %53 = sbr.rel (0) target = $region21
    $region20: #{tpu_custom_call.1} parent=1 // pred_region
      %54 = dma.done [#allocation4], 256
    $region21: #{tpu_custom_call.1} parent=1 // pred_fallthru
      _
    %55 = vsyncpa [#allocation3], 1
    %56 = vsyncpa [#allocation4], 1

</llo_original>
